<compile_context>
chip_gen: v5e
topology: v5e:2x2
jax: 0.10.0
libtpu: 0.0.40
codegen_flags: <defaults>
</compile_context>

<pallas_src>
import jax
import jax.numpy as jnp
from jax.experimental import pallas as pl
from jax.experimental.pallas import tpu as pltpu

HIDDEN = 24


def _round_up(x, m):
    return ((x + m - 1) // m) * m


def churn_mlp_kernel(xt_ref, w1_ref, b1_ref, w2_ref, b2_ref, w3_ref, b3_ref, o_ref):
    """Fused 3-layer MLP, feature-major.

    xt_ref : (D_in, bt)   activations, batch on the lane axis (possibly bf16)
    w*_ref : (out, in)    PyTorch weight layout
    b*_ref : (out, 1)     broadcasts over lanes (no XLU work)
    o_ref  : (D_out, bt)
    """
    x = xt_ref[...].astype(jnp.float32)                     # (D_in, bt)

    # input_layer + ReLU
    h = jnp.dot(w1_ref[...], x, preferred_element_type=jnp.float32) + b1_ref[...]
    h = jnp.maximum(h, 0.0)

    # h1 + sigmoid
    h = jnp.dot(w2_ref[...], h, preferred_element_type=jnp.float32) + b2_ref[...]
    h = jax.nn.sigmoid(h)

    # out + sigmoid
    y = jnp.dot(w3_ref[...], h, preferred_element_type=jnp.float32) + b3_ref[...]
    o_ref[...] = jax.nn.sigmoid(y).astype(o_ref.dtype)


def churn_mlp(x, params, *, batch_tile=None, input_dtype=jnp.float32):
    """x: (B, input_dim). params: PyTorch-layout weights (out,in) + biases (out,1).

    Returns (B, output_dim) float32 churn probabilities.
    `input_dtype=jnp.bfloat16` halves HBM traffic on x; accumulation stays f32.
    """
    B, D_in = x.shape
    D_out = params["w3"].shape[0]

    # Batch tile: multiple of 128 (batch is the lane axis). Default targets the
    # 512-2048 row sweet spot but never exceeds the (padded) batch.
    if batch_tile is None:
        batch_tile = min(1024, _round_up(B, 128))
    assert batch_tile % 128 == 0, "batch_tile must be a multiple of 128 (lane axis)"

    # Pad ragged batches to a whole number of tiles; padded lanes are sliced off.
    B_pad = _round_up(B, batch_tile)
    grid = (B_pad // batch_tile,)

    xt = jnp.transpose(x.astype(input_dtype))               # (D_in, B)
    if B_pad != B:
        xt = jnp.pad(xt, ((0, 0), (0, B_pad - B)))

    # VMEM estimate: double-buffered x/out tiles + resident weights.
    in_bytes = jnp.dtype(input_dtype).itemsize
    est = (2 * D_in * batch_tile * in_bytes
           + 2 * D_out * batch_tile * 4
           + sum(int(v.size) * v.dtype.itemsize for v in params.values()))
    vmem_limit = None
    if est > 32 * 1024 * 1024:
        # cap at 64 MiB so the same tiling also fits v7x physical VMEM
        vmem_limit = min(2 * est, 64 * 1024 * 1024)

    full = lambda shape: pl.BlockSpec(shape, lambda i: (0,) * len(shape))

    out_t = pl.pallas_call(
        churn_mlp_kernel,
        out_shape=jax.ShapeDtypeStruct((D_out, B_pad), jnp.float32),
        grid_spec=pltpu.PrefetchScalarGridSpec(
            num_scalar_prefetch=0,
            grid=grid,
            in_specs=[
                pl.BlockSpec((D_in, batch_tile), lambda i: (0, i)),   # x^T tile
                full(params["w1"].shape),                             # (24, D_in)
                full(params["b1"].shape),                             # (24, 1)
                full(params["w2"].shape),                             # (24, 24)
                full(params["b2"].shape),                             # (24, 1)
                full(params["w3"].shape),                             # (D_out, 24)
                full(params["b3"].shape),                             # (D_out, 1)
            ],
            out_specs=pl.BlockSpec((D_out, batch_tile), lambda i: (0, i)),
        ),
        compiler_params=pltpu.CompilerParams(
            dimension_semantics=("parallel",),
            vmem_limit_bytes=vmem_limit,
        ),
    )(xt, params["w1"], params["b1"], params["w2"], params["b2"],
      params["w3"], params["b3"])

    return jnp.transpose(out_t[:, :B])                      # (B, D_out)


def init_params(key, input_dim, output_dim, hidden=HIDDEN):
    """torch.nn.Linear-style init, PyTorch layout: W (out,in), b (out,1)."""
    ks = jax.random.split(key, 6)

    def linear(kw, kb, fan_in, fan_out):
        bound = 1.0 / jnp.sqrt(fan_in)
        w = jax.random.uniform(kw, (fan_out, fan_in), jnp.float32, -bound, bound)
        b = jax.random.uniform(kb, (fan_out, 1), jnp.float32, -bound, bound)
        return w, b

    w1, b1 = linear(ks[0], ks[1], input_dim, hidden)
    w2, b2 = linear(ks[2], ks[3], hidden, hidden)
    w3, b3 = linear(ks[4], ks[5], hidden, output_dim)
    return dict(w1=w1, b1=b1, w2=w2, b2=b2, w3=w3, b3=b3)


def churn_mlp_ref(x, p):
    h = jnp.maximum(x @ p["w1"].T + p["b1"].T, 0.0)
    h = jax.nn.sigmoid(h @ p["w2"].T + p["b2"].T)
    return jax.nn.sigmoid(h @ p["w3"].T + p["b3"].T)


if __name__ == "__main__":
    key = jax.random.PRNGKey(0)
    k_x, k_x2, k_p = jax.random.split(key, 3)

    batch, input_dim, output_dim = 8, 16, 2
    params = init_params(k_p, input_dim, output_dim)

    # Small batch (padded internally to one 128-lane tile), full f32 path.
    x = jax.random.normal(k_x, (batch, input_dim), jnp.float32)
    out = jax.block_until_ready(churn_mlp(x, params))
    ref = churn_mlp_ref(x, params)
    assert out.shape == (batch, output_dim)
    assert jnp.allclose(out, ref, atol=1e-5, rtol=1e-5), "f32 path mismatch"

    # Multi-tile grid (3 steps) with bf16 inputs (halved HBM traffic, f32 accum).
    x2 = jax.random.normal(k_x2, (384, input_dim), jnp.float32)
    out2 = jax.block_until_ready(
        churn_mlp(x2, params, batch_tile=128, input_dtype=jnp.bfloat16))
    ref2 = churn_mlp_ref(x2, params)
    assert out2.shape == (384, output_dim)
    assert jnp.max(jnp.abs(out2 - ref2)) < 3e-2, "bf16 path mismatch"

    print("KERNEL_OK")
</pallas_src>

<mosaic_0001>
module attributes {stable_mosaic.version = 11 : i64} {
  func.func @churn_mlp_kernel(%arg0: i32, %arg1: memref<16x128xf32, #tpu.memory_space<vmem>>, %arg2: memref<24x16xf32, #tpu.memory_space<vmem>>, %arg3: memref<24x1xf32, #tpu.memory_space<vmem>>, %arg4: memref<24x24xf32, #tpu.memory_space<vmem>>, %arg5: memref<24x1xf32, #tpu.memory_space<vmem>>, %arg6: memref<2x24xf32, #tpu.memory_space<vmem>>, %arg7: memref<2x1xf32, #tpu.memory_space<vmem>>, %arg8: memref<2x128xf32, #tpu.memory_space<vmem>>) attributes {dimension_semantics = [#tpu.dimension_semantics<parallel>], iteration_bounds = array<i64: 1>, scalar_prefetch = 0 : i64, scratch_operands = 0 : i64, tpu.core_type = #tpu.core_type<tc>, window_params = [{transform_indices = @transform_0, window_bounds = array<i64: 16, 128>}, {pipeline_mode = #tpu.pipeline_mode<synchronous>, transform_indices = @transform_1, window_bounds = array<i64: 24, 16>}, {pipeline_mode = #tpu.pipeline_mode<synchronous>, transform_indices = @transform_2, window_bounds = array<i64: 24, 1>}, {pipeline_mode = #tpu.pipeline_mode<synchronous>, transform_indices = @transform_3, window_bounds = array<i64: 24, 24>}, {pipeline_mode = #tpu.pipeline_mode<synchronous>, transform_indices = @transform_4, window_bounds = array<i64: 24, 1>}, {pipeline_mode = #tpu.pipeline_mode<synchronous>, transform_indices = @transform_5, window_bounds = array<i64: 2, 24>}, {pipeline_mode = #tpu.pipeline_mode<synchronous>, transform_indices = @transform_6, window_bounds = array<i64: 2, 1>}, {transform_indices = @transform_7, window_bounds = array<i64: 2, 128>}]} {
    %c0 = arith.constant 0 : index
    %c0_0 = arith.constant 0 : index
    %0 = vector.load %arg1[%c0, %c0_0] : memref<16x128xf32, #tpu.memory_space<vmem>>, vector<16x128xf32>
    %c0_1 = arith.constant 0 : index
    %c0_2 = arith.constant 0 : index
    %1 = vector.load %arg2[%c0_1, %c0_2] : memref<24x16xf32, #tpu.memory_space<vmem>>, vector<24x16xf32>
    %cst = arith.constant dense<0.000000e+00> : vector<24x128xf32>
    %2 = tpu.matmul %1, %0, %cst {dimension_numbers = #tpu.dot_dimension_numbers<[1], [0], [0], [1], [0, 0, 1, 1], [], []>} : vector<24x16xf32>, vector<16x128xf32>, vector<24x128xf32> -> vector<24x128xf32>
    %c0_3 = arith.constant 0 : index
    %c0_4 = arith.constant 0 : index
    %3 = vector.load %arg3[%c0_3, %c0_4] : memref<24x1xf32, #tpu.memory_space<vmem>>, vector<24x1xf32>
    %4 = vector.broadcast %3 : vector<24x1xf32> to vector<24x128xf32>
    %5 = arith.addf %2, %4 : vector<24x128xf32>
    %cst_5 = arith.constant 0.000000e+00 : f32
    %6 = vector.broadcast %cst_5 : f32 to vector<24x128xf32>
    %7 = arith.maximumf %5, %6 : vector<24x128xf32>
    %c0_6 = arith.constant 0 : index
    %c0_7 = arith.constant 0 : index
    %8 = vector.load %arg4[%c0_6, %c0_7] : memref<24x24xf32, #tpu.memory_space<vmem>>, vector<24x24xf32>
    %cst_8 = arith.constant dense<0.000000e+00> : vector<24x128xf32>
    %9 = tpu.matmul %8, %7, %cst_8 {dimension_numbers = #tpu.dot_dimension_numbers<[1], [0], [0], [1], [0, 0, 1, 1], [], []>} : vector<24x24xf32>, vector<24x128xf32>, vector<24x128xf32> -> vector<24x128xf32>
    %c0_9 = arith.constant 0 : index
    %c0_10 = arith.constant 0 : index
    %10 = vector.load %arg5[%c0_9, %c0_10] : memref<24x1xf32, #tpu.memory_space<vmem>>, vector<24x1xf32>
    %11 = vector.broadcast %10 : vector<24x1xf32> to vector<24x128xf32>
    %12 = arith.addf %9, %11 : vector<24x128xf32>
    %13 = arith.negf %12 : vector<24x128xf32>
    %14 = math.exp %13 : vector<24x128xf32>
    %cst_11 = arith.constant 1.000000e+00 : f32
    %15 = vector.broadcast %cst_11 : f32 to vector<24x128xf32>
    %16 = arith.addf %15, %14 : vector<24x128xf32>
    %17 = arith.divf %15, %16 : vector<24x128xf32>
    %c0_12 = arith.constant 0 : index
    %c0_13 = arith.constant 0 : index
    %18 = vector.load %arg6[%c0_12, %c0_13] : memref<2x24xf32, #tpu.memory_space<vmem>>, vector<2x24xf32>
    %cst_14 = arith.constant dense<0.000000e+00> : vector<2x128xf32>
    %19 = tpu.matmul %18, %17, %cst_14 {dimension_numbers = #tpu.dot_dimension_numbers<[1], [0], [0], [1], [0, 0, 1, 1], [], []>} : vector<2x24xf32>, vector<24x128xf32>, vector<2x128xf32> -> vector<2x128xf32>
    %c0_15 = arith.constant 0 : index
    %c0_16 = arith.constant 0 : index
    %20 = vector.load %arg7[%c0_15, %c0_16] : memref<2x1xf32, #tpu.memory_space<vmem>>, vector<2x1xf32>
    %21 = vector.broadcast %20 : vector<2x1xf32> to vector<2x128xf32>
    %22 = arith.addf %19, %21 : vector<2x128xf32>
    %23 = arith.negf %22 : vector<2x128xf32>
    %24 = math.exp %23 : vector<2x128xf32>
    %cst_17 = arith.constant 1.000000e+00 : f32
    %25 = vector.broadcast %cst_17 : f32 to vector<2x128xf32>
    %26 = arith.addf %25, %24 : vector<2x128xf32>
    %27 = arith.divf %25, %26 : vector<2x128xf32>
    %c0_18 = arith.constant 0 : index
    %c0_19 = arith.constant 0 : index
    %28 = vector.load %arg8[%c0_18, %c0_19] : memref<2x128xf32, #tpu.memory_space<vmem>>, vector<2x128xf32>
    tpu.vector_store %arg8[%c0_18, %c0_19], %27 {strides = array<i32>} : memref<2x128xf32, #tpu.memory_space<vmem>>, vector<2x128xf32>,
    return
  }
  func.func @transform_0(%arg0: i32) -> (i32, i32) {
    %c0_i32 = arith.constant 0 : i32
    %c0_i32_0 = arith.constant 0 : i32
    return %c0_i32, %arg0 : i32, i32
  }
  func.func @transform_1(%arg0: i32) -> (i32, i32) {
    %c0_i32 = arith.constant 0 : i32
    %c0_i32_0 = arith.constant 0 : i32
    %c0_i32_1 = arith.constant 0 : i32
    return %c0_i32, %c0_i32_0 : i32, i32
  }
  func.func @transform_2(%arg0: i32) -> (i32, i32) {
    %c0_i32 = arith.constant 0 : i32
    %c0_i32_0 = arith.constant 0 : i32
    %c0_i32_1 = arith.constant 0 : i32
    return %c0_i32, %c0_i32_0 : i32, i32
  }
  func.func @transform_3(%arg0: i32) -> (i32, i32) {
    %c0_i32 = arith.constant 0 : i32
    %c0_i32_0 = arith.constant 0 : i32
    %c0_i32_1 = arith.constant 0 : i32
    return %c0_i32, %c0_i32_0 : i32, i32
  }
  func.func @transform_4(%arg0: i32) -> (i32, i32) {
    %c0_i32 = arith.constant 0 : i32
    %c0_i32_0 = arith.constant 0 : i32
    %c0_i32_1 = arith.constant 0 : i32
    return %c0_i32, %c0_i32_0 : i32, i32
  }
  func.func @transform_5(%arg0: i32) -> (i32, i32) {
    %c0_i32 = arith.constant 0 : i32
    %c0_i32_0 = arith.constant 0 : i32
    %c0_i32_1 = arith.constant 0 : i32
    return %c0_i32, %c0_i32_0 : i32, i32
  }
  func.func @transform_6(%arg0: i32) -> (i32, i32) {
    %c0_i32 = arith.constant 0 : i32
    %c0_i32_0 = arith.constant 0 : i32
    %c0_i32_1 = arith.constant 0 : i32
    return %c0_i32, %c0_i32_0 : i32, i32
  }
  func.func @transform_7(%arg0: i32) -> (i32, i32) {
    %c0_i32 = arith.constant 0 : i32
    %c0_i32_0 = arith.constant 0 : i32
    return %c0_i32, %arg0 : i32, i32
  }
}

</mosaic_0001>

<llo_original>
// kernel: tpu_custom_call.1
$region0: #{tpu_custom_call.1}
  #allocation0 [shape = 'u32[]', space=smem, size = 0x4, offset = 0x4, fixed_abs, tag = 'smem constant byte address 0x4 - core index']
  #allocation1 [shape = 'u32[72,128]{1,0:T(1,128)}', space=vmem, size = 0x9000, scoped, tag = 'internal scratch']
  %s0 = inlined_call_operand.vmem [shape: f32[16,128], index: 0, kind: input, shape index: {}]
  %s1 = inlined_call_operand.vmem [shape: f32[24,16], index: 1, kind: input, shape index: {}]
  %s2 = inlined_call_operand.vmem [shape: f32[24,1], index: 2, kind: input, shape index: {}]
  %s3 = inlined_call_operand.vmem [shape: f32[24,24], index: 3, kind: input, shape index: {}]
  %s4 = inlined_call_operand.vmem [shape: f32[24,1], index: 4, kind: input, shape index: {}]
  %s5 = inlined_call_operand.vmem [shape: f32[2,24], index: 5, kind: input, shape index: {}]
  %s6 = inlined_call_operand.vmem [shape: f32[2,1], index: 6, kind: input, shape index: {}]
  %s7 = inlined_call_operand.hbm [shape: f32[2,128], index: 7, kind: output, shape index: {}]
  %s8 = sld [smem:[#allocation0]]
  $region38: #{tpu_custom_call.1} parent=0
    _
  %s10 = ssub.s32 1, %s8
  %s11 = scalar_select 0, %s10, %s8
  $region1: #{tpu_custom_call.1} parent=0
    #allocation2 [shape = 'u8[1024]{0}', space=vmem, size = 0x400, scoped, tag = 'output window, operand 0, single buffered']
    #allocation3 [shape = 's32[1]{0}', space=sflag, size = 0x4, scoped, tag = 'scoped memory for tpu_custom_call.1']
    %12 = vsyncpa [#allocation3], 0
    // Predicated region
    $region2: #{tpu_custom_call.1} parent=1 // pred_check
      _
    $region3: #{tpu_custom_call.1} parent=1 // pred_check_branch
      %14 = sbr.rel (0) target = $region5
    $region4: #{tpu_custom_call.1} parent=1 // pred_region
      _
    $region5: #{tpu_custom_call.1} parent=1 // pred_fallthru
      _
    // Predicated region
    $region6: #{tpu_custom_call.1} parent=1 // pred_check
      _
    $region7: #{tpu_custom_call.1} parent=1 // pred_check_branch
      %16 = sbr.rel (0) target = $region9
    $region8: #{tpu_custom_call.1} parent=1 // pred_region
      _
    $region9: #{tpu_custom_call.1} parent=1 // pred_fallthru
      _
    // Predicated region
    $region10: #{tpu_custom_call.1} parent=1 // pred_check
      _
    $region11: #{tpu_custom_call.1} parent=1 // pred_check_branch
      %18 = sbr.rel (0) target = $region13
    $region12: #{tpu_custom_call.1} parent=1 // pred_region
      _
    $region13: #{tpu_custom_call.1} parent=1 // pred_fallthru
      _
    // Predicated region
    $region14: #{tpu_custom_call.1} parent=1 // pred_check
      _
    $region15: #{tpu_custom_call.1} parent=1 // pred_check_branch
      %20 = sbr.rel (0) target = $region17
    $region16: #{tpu_custom_call.1} parent=1 // pred_region
      _
    $region17: #{tpu_custom_call.1} parent=1 // pred_fallthru
      _
    // Predicated region
    $region18: #{tpu_custom_call.1} parent=1 // pred_check
      _
    $region19: #{tpu_custom_call.1} parent=1 // pred_check_branch
      %22 = sbr.rel (0) target = $region21
    $region20: #{tpu_custom_call.1} parent=1 // pred_region
      _
    $region21: #{tpu_custom_call.1} parent=1 // pred_fallthru
      _
    // Predicated region
    $region22: #{tpu_custom_call.1} parent=1 // pred_check
      _
    $region23: #{tpu_custom_call.1} parent=1 // pred_check_branch
      %24 = sbr.rel (0) target = $region25
    $region24: #{tpu_custom_call.1} parent=1 // pred_region
      _
    $region25: #{tpu_custom_call.1} parent=1 // pred_fallthru
      _
    // Predicated region
    $region26: #{tpu_custom_call.1} parent=1 // pred_check
      _
    $region27: #{tpu_custom_call.1} parent=1 // pred_check_branch
      %26 = sbr.rel (0) target = $region29
    $region28: #{tpu_custom_call.1} parent=1 // pred_region
      _
    $region29: #{tpu_custom_call.1} parent=1 // pred_fallthru
      _
    %v27 = vld [vmem:[%s0] sm:$0xff]
    %v28 = vld [vmem:[%s0 + $0x8] sm:$0xff]
    %v29 = vld [vmem:[%s1] sm:$0xff]
    %v30 = vld [vmem:[%s1 + $0x8] sm:$0xff]
    %v31 = vld [vmem:[%s1 + $0x10] sm:$0xff]
    %v32 = vld [vmem:[%s2] sm:$0xff]
    %v33 = vld [vmem:[%s2 + $0x8] sm:$0xff]
    %v34 = vld [vmem:[%s2 + $0x10] sm:$0xff]
    %36 = vset.pattern.permute.xlu0 0
    %37 = vperm.xlu0 %36, %v32
    %v38 = vpop.permute.xlu0 %37
    %41 = vset.pattern.permute.xlu0 0
    %42 = vperm.xlu0 %41, %v33
    %v43 = vpop.permute.xlu0 %42
    %46 = vset.pattern.permute.xlu0 0
    %47 = vperm.xlu0 %46, %v34
    %v48 = vpop.permute.xlu0 %47
    %vm50 = vcmask 130048
    %v52 = vsel %vm50, %v29, 0
    %v55 = vsel %vm50, %v30, 0
    %v58 = vsel %vm50, %v31, 0
    %60 = vmatpush.msra.mxu0 0.0
    %61 = vmatpush.msra.mxu0 0.0
    %62 = vmatpush.msra.mxu0 0.0
    %63 = vmatpush.msra.mxu0 0.0
    %64 = vmatpush.msra.mxu0 0.0
    %65 = vmatpush.msra.mxu0 0.0
    %66 = vmatpush.msra.mxu0 0.0
    %67 = vmatpush.msra.mxu0 0.0
    %68 = vmatpush.msra.mxu0 0.0
    %69 = vmatpush.msra.mxu0 0.0
    %70 = vmatpush.msra.mxu0 0.0
    %71 = vmatpush.msra.mxu0 0.0
    %72 = vmatpush.msra.mxu0 0.0
    %73 = vmatpush.msra.mxu0 0.0
    %74 = vmatpush.msra.mxu0 %v28
    %75 = vmatpush.msra.mxu0 %v27
    %76 = vmatmul.f32.gmra.mxu0 %v52
    %v77 = vpop.f32.mrf.mxu0
    %v78 = vadd.f32 %v38, %v77
    %79 = vmatmul.f32.gmra.mxu0 %v55
    %v80 = vpop.f32.mrf.mxu0
    %v81 = vadd.f32 %v43, %v80
    %82 = vmatmul.f32.gmra.mxu0 %v58
    %v83 = vpop.f32.mrf.mxu0
    %v84 = vadd.f32 %v48, %v83
    %85 = vdwg.mxu0
    %v86 = vmax.f32 %v78, 0.0
    %v87 = vmax.f32 %v81, 0.0
    %v88 = vmax.f32 %v84, 0.0
    %v89 = vld [vmem:[%s3] sm:$0xff]
    %v90 = vld [vmem:[%s3 + $0x8] sm:$0xff]
    %v91 = vld [vmem:[%s3 + $0x10] sm:$0xff]
    %v92 = vld [vmem:[%s4] sm:$0xff]
    %v93 = vld [vmem:[%s4 + $0x8] sm:$0xff]
    %v94 = vld [vmem:[%s4 + $0x10] sm:$0xff]
    %96 = vset.pattern.permute.xlu0 0
    %97 = vperm.xlu0 %96, %v92
    %v98 = vpop.permute.xlu0 %97
    %101 = vset.pattern.permute.xlu0 0
    %102 = vperm.xlu0 %101, %v93
    %v103 = vpop.permute.xlu0 %102
    %106 = vset.pattern.permute.xlu0 0
    %107 = vperm.xlu0 %106, %v94
    %v108 = vpop.permute.xlu0 %107
    %vm110 = vcmask 195584
    %v112 = vsel %vm110, %v89, 0
    %v115 = vsel %vm110, %v90, 0
    %v118 = vsel %vm110, %v91, 0
    %120 = vmatpush.msra.mxu0 0.0
    %121 = vmatpush.msra.mxu0 0.0
    %122 = vmatpush.msra.mxu0 0.0
    %123 = vmatpush.msra.mxu0 0.0
    %124 = vmatpush.msra.mxu0 0.0
    %125 = vmatpush.msra.mxu0 0.0
    %126 = vmatpush.msra.mxu0 0.0
    %127 = vmatpush.msra.mxu0 0.0
    %128 = vmatpush.msra.mxu0 0.0
    %129 = vmatpush.msra.mxu0 0.0
    %130 = vmatpush.msra.mxu0 0.0
    %131 = vmatpush.msra.mxu0 0.0
    %132 = vmatpush.msra.mxu0 0.0
    %133 = vmatpush.msra.mxu0 %v88
    %134 = vmatpush.msra.mxu0 %v87
    %135 = vmatpush.msra.mxu0 %v86
    %136 = vmatmul.f32.gmra.mxu0 %v112
    %v137 = vpop.f32.mrf.mxu0
    %v138 = vadd.f32 %v98, %v137
    %139 = vmatmul.f32.gmra.mxu0 %v115
    %v140 = vpop.f32.mrf.mxu0
    %v141 = vadd.f32 %v103, %v140
    %142 = vmatmul.f32.gmra.mxu0 %v118
    %v143 = vpop.f32.mrf.mxu0
    %v144 = vadd.f32 %v108, %v143
    %145 = vdwg.mxu0
    %v146 = vxor.u32 %v138, 2147483648
    %v147 = vxor.u32 %v141, 2147483648
    %v148 = vxor.u32 %v144, 2147483648
    %v149 = vmul.f32 %v146, 1.442695
    %v150 = vpow.pop %v149
    %v151 = vmul.f32 %v147, 1.442695
    %v152 = vpow.pop %v151
    %v153 = vmul.f32 %v148, 1.442695
    %v154 = vpow.pop %v153
    %v155 = vadd.f32 %v150, 1.0
    %v156 = vadd.f32 %v152, 1.0
    %v157 = vadd.f32 %v154, 1.0
    %v158 = vrcp.pop %v155
    %v159 = vmul.f32 %v155, %v158
    %v160 = vsub.f32 1.0, %v159
    %v161 = vmul.f32 %v158, %v160
    %v162 = vadd.f32 %v158, %v161
    %vm163 = vweird.f32 %v155
    %vm164 = vweird.f32 %v158
    %vm165 = vmor %vm163, %vm164
    %v166 = vsel %vm165, %v158, %v162
    %v167 = vand.u32 2147483647, %v155
    %vm168 = vcmp.eq.f32.partialorder %v167, 8.507059e+37
    %v169 = vand.u32 %v155, 2147483648
    %v170 = vor.u32 1.1754944e-38, %v169
    %v171 = vsel %vm168, %v170, %v166
    %v172 = vmul.f32 1.0, %v171
    %v173 = vrcp.pop %v156
    %v174 = vmul.f32 %v156, %v173
    %v175 = vsub.f32 1.0, %v174
    %v176 = vmul.f32 %v173, %v175
    %v177 = vadd.f32 %v173, %v176
    %vm178 = vweird.f32 %v156
    %vm179 = vweird.f32 %v173
    %vm180 = vmor %vm178, %vm179
    %v181 = vsel %vm180, %v173, %v177
    %v182 = vand.u32 2147483647, %v156
    %vm183 = vcmp.eq.f32.partialorder %v182, 8.507059e+37
    %v184 = vand.u32 %v156, 2147483648
    %v185 = vor.u32 1.1754944e-38, %v184
    %v186 = vsel %vm183, %v185, %v181
    %v187 = vmul.f32 1.0, %v186
    %v188 = vrcp.pop %v157
    %v189 = vmul.f32 %v157, %v188
    %v190 = vsub.f32 1.0, %v189
    %v191 = vmul.f32 %v188, %v190
    %v192 = vadd.f32 %v188, %v191
    %vm193 = vweird.f32 %v157
    %vm194 = vweird.f32 %v188
    %vm195 = vmor %vm193, %vm194
    %v196 = vsel %vm195, %v188, %v192
    %v197 = vand.u32 2147483647, %v157
    %vm198 = vcmp.eq.f32.partialorder %v197, 8.507059e+37
    %v199 = vand.u32 %v157, 2147483648
    %v200 = vor.u32 1.1754944e-38, %v199
    %v201 = vsel %vm198, %v200, %v196
    %v202 = vmul.f32 1.0, %v201
    %v203 = vld [vmem:[%s5] sm:$0x3]
    %v204 = vld [vmem:[%s6] sm:$0x3]
    %206 = vset.pattern.permute.xlu0 0
    %207 = vperm.xlu0 %206, %v204
    %v208 = vpop.permute.xlu0 %207
    %v211 = vsel %vm110, %v203, 0
    %213 = vmatpush.msra.mxu0 0.0
    %214 = vmatpush.msra.mxu0 0.0
    %215 = vmatpush.msra.mxu0 0.0
    %216 = vmatpush.msra.mxu0 0.0
    %217 = vmatpush.msra.mxu0 0.0
    %218 = vmatpush.msra.mxu0 0.0
    %219 = vmatpush.msra.mxu0 0.0
    %220 = vmatpush.msra.mxu0 0.0
    %221 = vmatpush.msra.mxu0 0.0
    %222 = vmatpush.msra.mxu0 0.0
    %223 = vmatpush.msra.mxu0 0.0
    %224 = vmatpush.msra.mxu0 0.0
    %225 = vmatpush.msra.mxu0 0.0
    %226 = vmatpush.msra.mxu0 %v202
    %227 = vmatpush.msra.mxu0 %v187
    %228 = vmatpush.msra.mxu0 %v172
    %229 = vmatmul.f32.gmra.mxu0 %v211
    %v230 = vpop.f32.mrf.mxu0
    %v231 = vadd.f32 %v208, %v230
    %232 = vdwg.mxu0
    %v233 = vxor.u32 %v231, 2147483648
    %v234 = vmul.f32 %v233, 1.442695
    %v235 = vpow.pop %v234
    %v236 = vadd.f32 %v235, 1.0
    %v237 = vrcp.pop %v236
    %v238 = vmul.f32 %v236, %v237
    %v239 = vsub.f32 1.0, %v238
    %v240 = vmul.f32 %v237, %v239
    %v241 = vadd.f32 %v237, %v240
    %vm242 = vweird.f32 %v236
    %vm243 = vweird.f32 %v237
    %vm244 = vmor %vm242, %vm243
    %v245 = vsel %vm244, %v237, %v241
    %v246 = vand.u32 2147483647, %v236
    %vm247 = vcmp.eq.f32.partialorder %v246, 8.507059e+37
    %v248 = vand.u32 %v236, 2147483648
    %v249 = vor.u32 1.1754944e-38, %v248
    %v250 = vsel %vm247, %v249, %v245
    %v251 = vmul.f32 1.0, %v250
    %252 = vst [vmem:[#allocation2] sm:$0x3] %v251
    // Predicated region
    $region30: #{tpu_custom_call.1} parent=1 // pred_check
      _
    $region31: #{tpu_custom_call.1} parent=1 // pred_check_branch
      %254 = sbr.rel (0) target = $region33
    $region32: #{tpu_custom_call.1} parent=1 // pred_region
      %256 = vsyncadd [#allocation3], 0
      %s258 = sshll.u32 [#allocation2], 4
      %s259 = int_to_ptr.vmem [resolvable:$true] %s258
      %s260 = sshll.u32 %s7, 4
      %s261 = int_to_ptr.hbm [resolvable:$true] %s260
      %263 = dma.vmem_to_hbm [thread:$0]  %s259, 32, %s261, [#allocation3]
    $region33: #{tpu_custom_call.1} parent=1 // pred_fallthru
      _
    // Predicated region
    $region34: #{tpu_custom_call.1} parent=1 // pred_check
      _
    $region35: #{tpu_custom_call.1} parent=1 // pred_check_branch
      %265 = sbr.rel (0) target = $region37
    $region36: #{tpu_custom_call.1} parent=1 // pred_region
      %267 = dma.done [#allocation3], 32
    $region37: #{tpu_custom_call.1} parent=1 // pred_fallthru
      _
    %268 = vsyncpa [#allocation3], 1

</llo_original>
